<compile_context>
chip_gen: v7x
topology: tpu7x:2x2x1
jax: 0.10.0
libtpu: 0.0.40
codegen_flags: <defaults>
</compile_context>

<pallas_src>
import math
import functools

import jax
import jax.numpy as jnp
from jax.experimental import pallas as pl
from jax.experimental.pallas import tpu as pltpu


# ---------------------------------------------------------------------------
# Generation-aware VMEM limit (~75% of physical: v5e/v6e 128 MiB -> 96, v7x 64 -> 48)
# ---------------------------------------------------------------------------
@functools.lru_cache(maxsize=1)
def _vmem_limit():
    try:
        cap = pltpu.get_tpu_info().vmem_capacity_bytes
    except Exception:
        cap = 128 * 1024 * 1024
    return int(min(cap * 3 // 4, 100 * 1024 * 1024))


# ---------------------------------------------------------------------------
# Linear kernel: y = x @ Wt + b   (Wt is the pre-transposed nn.Linear weight)
# ---------------------------------------------------------------------------
def _linear_kernel(x_ref, wt_ref, b_ref, o_ref):
    x = x_ref[...].astype(jnp.bfloat16)              # (TM, D_in)
    wt = wt_ref[...]                                 # (D_in, TN) bf16
    acc = jnp.dot(x, wt, preferred_element_type=jnp.float32)
    o_ref[...] = (acc + b_ref[...]).astype(o_ref.dtype)   # bias once, in epilogue


def _linear(x2d, wt_bf16, b, *, out_dtype, tm=512, n_split=4096, tn=2048):
    """x2d: (M, D_in); wt_bf16: (D_in, D_out) bf16; b: (1, D_out) f32."""
    M, d_in = x2d.shape
    d_out = wt_bf16.shape[1]

    tm = min(tm, M)
    # v7x megacore: keep at least two parallel row blocks when M is big enough.
    if M >= 256 and pl.cdiv(M, tm) < 2:
        tm = (((M + 1) // 2) + 7) // 8 * 8

    def build(single_buffer_resident):
        if d_out <= n_split:
            # Resident weight / bias: constant index_map, so double-buffering them
            # is pure VMEM waste (critical on v7x's 64 MiB VMEM).
            if single_buffer_resident:
                w_spec = pl.BlockSpec((d_in, d_out), lambda i: (0, 0),
                                      pipeline_mode=pl.Buffered(1))
                b_spec = pl.BlockSpec((1, d_out), lambda i: (0, 0),
                                      pipeline_mode=pl.Buffered(1))
            else:
                w_spec = pl.BlockSpec((d_in, d_out), lambda i: (0, 0))
                b_spec = pl.BlockSpec((1, d_out), lambda i: (0, 0))
            grid = (pl.cdiv(M, tm),)
            in_specs = [pl.BlockSpec((tm, d_in), lambda i: (i, 0)), w_spec, b_spec]
            out_specs = pl.BlockSpec((tm, d_out), lambda i: (i, 0))
            dims = ("parallel",)
        else:
            # Large d_out (e.g. d_model >= 4096 on v7x): tile N so the weight block
            # stays bounded; weight blocks change with j, keep default buffering.
            tn_eff = min(tn, d_out)
            grid = (pl.cdiv(M, tm), pl.cdiv(d_out, tn_eff))
            in_specs = [
                pl.BlockSpec((tm, d_in), lambda i, j: (i, 0)),
                pl.BlockSpec((d_in, tn_eff), lambda i, j: (0, j)),
                pl.BlockSpec((1, tn_eff), lambda i, j: (0, j)),
            ]
            out_specs = pl.BlockSpec((tm, tn_eff), lambda i, j: (i, j))
            dims = ("parallel", "parallel")

        return pl.pallas_call(
            _linear_kernel,
            out_shape=jax.ShapeDtypeStruct((M, d_out), out_dtype),
            grid_spec=pltpu.PrefetchScalarGridSpec(
                num_scalar_prefetch=0, grid=grid,
                in_specs=in_specs, out_specs=out_specs),
            compiler_params=pltpu.CompilerParams(
                dimension_semantics=dims,
                vmem_limit_bytes=_vmem_limit()),
        )(x2d, wt_bf16, b)

    try:
        return build(True)
    except Exception:
        # TODO(synk): pipeline_mode=pl.Buffered(1) unsupported on this jax version;
        # fall back to default double-buffered resident weights.
        return build(False)


# ---------------------------------------------------------------------------
# Flash attention kernel (online softmax), per-head static loop.
#   q:  (B, S, D)        bf16  heads concatenated on lanes (already scaled by 1/sqrt(dk))
#   kt: (B, H, d_k, S)   bf16  K pre-transposed -> lane-dense (tk on lanes)
#   v:  (B, S, D)        bf16  heads concatenated on lanes
#   mb: (S, S)           bf16  additive mask bias (0 kept, -1e9 masked)
#   o:  (B, S, D)        bf16  concatenated-head context (lane-dense writeback)
# ---------------------------------------------------------------------------
def _flash_attn_kernel(q_ref, kt_ref, v_ref, mb_ref, o_ref,
                       m_sc, l_sc, acc_sc, *, n_heads, d_k):
    ki = pl.program_id(2)

    @pl.when(ki == 0)
    def _():
        m_sc[...] = jnp.full(m_sc.shape, -jnp.inf, dtype=m_sc.dtype)
        l_sc[...] = jnp.zeros(l_sc.shape, dtype=l_sc.dtype)
        acc_sc[...] = jnp.zeros(acc_sc.shape, dtype=acc_sc.dtype)

    mask_bias = mb_ref[...].astype(jnp.float32)          # (TQ, TK)

    # Static head loop: live working set is one (TQ, TK) f32 score tile.
    for h in range(n_heads):
        lo = h * d_k
        q_h = q_ref[0, :, lo:lo + d_k]                    # (TQ, d_k) bf16 (pre-scaled)
        k_h = kt_ref[0, h]                                # (d_k, TK) bf16
        v_h = v_ref[0, :, lo:lo + d_k]                    # (TK, d_k) bf16

        s = jnp.dot(q_h, k_h, preferred_element_type=jnp.float32)   # (TQ, TK)
        s = s + mask_bias

        m_prev = m_sc[h]                                  # (TQ, 1)
        m_new = jnp.maximum(m_prev, s.max(axis=-1, keepdims=True))
        alpha = jnp.exp(m_prev - m_new)
        p = jnp.exp(s - m_new)                            # (TQ, TK) f32

        l_sc[h] = alpha * l_sc[h] + p.sum(axis=-1, keepdims=True)
        pv = jnp.dot(p.astype(jnp.bfloat16), v_h,
                     preferred_element_type=jnp.float32)  # (TQ, d_k)
        acc_sc[:, lo:lo + d_k] = alpha * acc_sc[:, lo:lo + d_k] + pv
        m_sc[h] = m_new

    @pl.when(ki == pl.num_programs(2) - 1)
    def _():
        for h in range(n_heads):
            lo = h * d_k
            inv_l = pl.reciprocal(l_sc[h], approx=True)   # EUP slot, ~free
            o_ref[0, :, lo:lo + d_k] = (
                acc_sc[:, lo:lo + d_k] * inv_l).astype(o_ref.dtype)


def _flash_attention(qb, kt, vb, mask_bias, *, n_heads, tq=256, tk=256):
    B, S, D = qb.shape
    d_k = D // n_heads
    tq = min(tq, S)
    tk = min(tk, S)
    assert S % tq == 0 and S % tk == 0, "seq length must be divisible by tile sizes"

    kernel = functools.partial(_flash_attn_kernel, n_heads=n_heads, d_k=d_k)
    return pl.pallas_call(
        kernel,
        out_shape=jax.ShapeDtypeStruct((B, S, D), jnp.bfloat16),
        grid_spec=pltpu.PrefetchScalarGridSpec(
            num_scalar_prefetch=0,
            grid=(B, S // tq, S // tk),
            in_specs=[
                pl.BlockSpec((1, tq, D), lambda b, qi, ki: (b, qi, 0)),
                pl.BlockSpec((1, n_heads, d_k, tk), lambda b, qi, ki: (b, 0, 0, ki)),
                pl.BlockSpec((1, tk, D), lambda b, qi, ki: (b, ki, 0)),
                pl.BlockSpec((tq, tk), lambda b, qi, ki: (qi, ki)),
            ],
            out_specs=pl.BlockSpec((1, tq, D), lambda b, qi, ki: (b, qi, 0)),
            scratch_shapes=[
                pltpu.VMEM((n_heads, tq, 1), jnp.float32),   # running max
                pltpu.VMEM((n_heads, tq, 1), jnp.float32),   # running sum
                pltpu.VMEM((tq, D), jnp.float32),            # accumulator (lane-dense)
            ],
        ),
        compiler_params=pltpu.CompilerParams(
            dimension_semantics=("parallel", "parallel", "arbitrary"),
            vmem_limit_bytes=_vmem_limit()),
    )(qb, kt, vb, mask_bias)


# ---------------------------------------------------------------------------
# Full MultiHeadAttentionBlock forward
# ---------------------------------------------------------------------------
def multi_head_attention(q, k, v, mask, params, *, n_heads):
    """q, k, v: (B, S, D) float32. mask: (S, S) float32 (0 = masked).

    TODO(synk): per-batch masks (B, 1, S, S) would need a batch index in the mask
    BlockSpec; only a shared (S, S) mask is supported here.
    """
    B, S, D = q.shape
    assert D % n_heads == 0
    d_k = D // n_heads
    scale = 1.0 / math.sqrt(d_k)
    wq, bq, wk, bk, wv, bv, wo, bo = params

    # Pre-transpose nn.Linear weights once in XLA, fold the softmax scale into the
    # Q projection, and cast weights to bf16.
    wqt = (wq.T * scale).astype(jnp.bfloat16)
    bq_s = (bq * scale).astype(jnp.float32)
    wkt = wk.T.astype(jnp.bfloat16)
    wvt = wv.T.astype(jnp.bfloat16)
    wot = wo.T.astype(jnp.bfloat16)

    M = B * S
    if (q is k) and (k is v):
        # Self-attention: fuse Q/K/V projections into one (D, 3D) matmul.
        w_qkv = jnp.concatenate([wqt, wkt, wvt], axis=1)        # (D, 3D)
        b_qkv = jnp.concatenate([bq_s, bk, bv], axis=1)         # (1, 3D)
        qkv = _linear(q.reshape(M, D), w_qkv, b_qkv, out_dtype=jnp.bfloat16)
        Q, K, V = qkv[:, :D], qkv[:, D:2 * D], qkv[:, 2 * D:]
    else:
        Q = _linear(q.reshape(M, D), wqt, bq_s, out_dtype=jnp.bfloat16)
        K = _linear(k.reshape(M, D), wkt, bk, out_dtype=jnp.bfloat16)
        V = _linear(v.reshape(M, D), wvt, bv, out_dtype=jnp.bfloat16)

    # Q and V stay in concatenated-head (B, S, D) layout (lane-dense, no transpose);
    # only K gets one XLA transpose into the MXU-stationary (B, H, d_k, S) layout.
    Qb = Q.reshape(B, S, D)
    Vb = V.reshape(B, S, D)
    Kt = K.reshape(B, S, n_heads, d_k).transpose(0, 2, 3, 1)    # (B, H, d_k, S)

    # Additive mask bias, bf16 to halve its per-step DMA (refetched every ki step).
    mask_bias = jnp.where(mask == 0, jnp.float32(-1e9), jnp.float32(0.0)
                          ).astype(jnp.bfloat16)

    ctx = _flash_attention(Qb, Kt, Vb, mask_bias, n_heads=n_heads)   # (B, S, D) bf16

    # Output projection: one K=D matmul on the already-concatenated heads.
    out = _linear(ctx.reshape(M, D), wot, bo, out_dtype=jnp.float32)
    return out.reshape(B, S, D)


# ---------------------------------------------------------------------------
# Plain-JAX reference mirroring the PyTorch forward (eval mode, f32)
# ---------------------------------------------------------------------------
def _reference_mha(q, k, v, mask, params, *, n_heads):
    B, S, D = q.shape
    d_k = D // n_heads
    wq, bq, wk, bk, wv, bv, wo, bo = params

    def proj(x, w, b):
        return x @ w.T + b

    Q = proj(q, wq, bq).reshape(B, S, n_heads, d_k).transpose(0, 2, 1, 3)
    K = proj(k, wk, bk).reshape(B, S, n_heads, d_k).transpose(0, 2, 1, 3)
    V = proj(v, wv, bv).reshape(B, S, n_heads, d_k).transpose(0, 2, 1, 3)

    scores = jnp.einsum("bhqd,bhkd->bhqk", Q, K) / math.sqrt(d_k)
    scores = jnp.where(mask[None, None] == 0, -1e9, scores)
    probs = jax.nn.softmax(scores, axis=-1)
    ctx = jnp.einsum("bhqk,bhkd->bhqd", probs, V)
    ctx = ctx.transpose(0, 2, 1, 3).reshape(B, S, D)
    return ctx @ wo.T + bo


if __name__ == "__main__":
    B, S, D, H = 2, 8, 32, 4  # batch, seq, d_model, heads

    key = jax.random.PRNGKey(0)
    keys = jax.random.split(key, 12)

    # Deterministic parameter init (nn.Linear-like uniform scale).
    lim = 1.0 / math.sqrt(D)

    def u(kk, shape):
        return jax.random.uniform(kk, shape, jnp.float32, -lim, lim)

    wq, bq = u(keys[0], (D, D)), u(keys[1], (1, D))
    wk, bk = u(keys[2], (D, D)), u(keys[3], (1, D))
    wv, bv = u(keys[4], (D, D)), u(keys[5], (1, D))
    wo, bo = u(keys[6], (D, D)), u(keys[7], (1, D))
    params = (wq, bq, wk, bk, wv, bv, wo, bo)

    x = jax.random.normal(keys[8], (B, S, D), jnp.float32)
    k_in = jax.random.normal(keys[9], (B, S, D), jnp.float32)
    v_in = jax.random.normal(keys[10], (B, S, D), jnp.float32)

    # Causal mask (1 = keep, 0 = masked), broadcast over batch and heads.
    mask = jnp.tril(jnp.ones((S, S), jnp.float32))

    # Self-attention (fused QKV projection path).
    out_self = jax.block_until_ready(
        multi_head_attention(x, x, x, mask, params, n_heads=H))
    ref_self = _reference_mha(x, x, x, mask, params, n_heads=H)
    assert out_self.shape == (B, S, D)
    assert jnp.allclose(out_self, ref_self, atol=5e-2, rtol=5e-2), \
        "self-attention mismatch vs reference"

    # Cross-attention (separate projection path).
    out_cross = jax.block_until_ready(
        multi_head_attention(x, k_in, v_in, mask, params, n_heads=H))
    ref_cross = _reference_mha(x, k_in, v_in, mask, params, n_heads=H)
    assert out_cross.shape == (B, S, D)
    assert jnp.allclose(out_cross, ref_cross, atol=5e-2, rtol=5e-2), \
        "cross-attention mismatch vs reference"

    print("KERNEL_OK")
</pallas_src>

<mosaic_0001>
module attributes {stable_mosaic.version = 11 : i64} {
  func.func @_linear_kernel(%arg0: i32, %arg1: memref<16x32xf32, #tpu.memory_space<vmem>>, %arg2: memref<32x96xbf16, #tpu.memory_space<vmem>>, %arg3: memref<1x96xf32, #tpu.memory_space<vmem>>, %arg4: memref<16x96xbf16, #tpu.memory_space<vmem>>) attributes {dimension_semantics = [#tpu.dimension_semantics<parallel>], iteration_bounds = array<i64: 1>, scalar_prefetch = 0 : i64, scratch_operands = 0 : i64, tpu.core_type = #tpu.core_type<tc>, window_params = [{transform_indices = @transform_0, window_bounds = array<i64: 16, 32>}, {pipeline_mode = #tpu.pipeline_mode<synchronous>, transform_indices = @transform_1, window_bounds = array<i64: 32, 96>}, {pipeline_mode = #tpu.pipeline_mode<synchronous>, transform_indices = @transform_2, window_bounds = array<i64: 1, 96>}, {transform_indices = @transform_3, window_bounds = array<i64: 16, 96>}]} {
    %c0 = arith.constant 0 : index
    %c0_0 = arith.constant 0 : index
    %0 = vector.load %arg1[%c0, %c0_0] : memref<16x32xf32, #tpu.memory_space<vmem>>, vector<16x32xf32>
    %1 = arith.truncf %0 : vector<16x32xf32> to vector<16x32xbf16>
    %c0_1 = arith.constant 0 : index
    %c0_2 = arith.constant 0 : index
    %2 = vector.load %arg2[%c0_1, %c0_2] : memref<32x96xbf16, #tpu.memory_space<vmem>>, vector<32x96xbf16>
    %cst = arith.constant dense<0.000000e+00> : vector<16x96xf32>
    %3 = tpu.matmul %1, %2, %cst {dimension_numbers = #tpu.dot_dimension_numbers<[1], [0], [0], [1], [0, 0, 1, 1], [], []>} : vector<16x32xbf16>, vector<32x96xbf16>, vector<16x96xf32> -> vector<16x96xf32>
    %c0_3 = arith.constant 0 : index
    %c0_4 = arith.constant 0 : index
    %4 = vector.load %arg3[%c0_3, %c0_4] : memref<1x96xf32, #tpu.memory_space<vmem>>, vector<1x96xf32>
    %5 = vector.broadcast %4 : vector<1x96xf32> to vector<16x96xf32>
    %6 = arith.addf %3, %5 : vector<16x96xf32>
    %7 = arith.truncf %6 : vector<16x96xf32> to vector<16x96xbf16>
    %c0_5 = arith.constant 0 : index
    %c0_6 = arith.constant 0 : index
    %8 = vector.load %arg4[%c0_5, %c0_6] : memref<16x96xbf16, #tpu.memory_space<vmem>>, vector<16x96xbf16>
    tpu.vector_store %arg4[%c0_5, %c0_6], %7 {strides = array<i32>} : memref<16x96xbf16, #tpu.memory_space<vmem>>, vector<16x96xbf16>,
    return
  }
  func.func @transform_0(%arg0: i32) -> (i32, i32) {
    %c0_i32 = arith.constant 0 : i32
    %c0_i32_0 = arith.constant 0 : i32
    return %arg0, %c0_i32 : i32, i32
  }
  func.func @transform_1(%arg0: i32) -> (i32, i32) {
    %c0_i32 = arith.constant 0 : i32
    %c0_i32_0 = arith.constant 0 : i32
    %c0_i32_1 = arith.constant 0 : i32
    return %c0_i32, %c0_i32_0 : i32, i32
  }
  func.func @transform_2(%arg0: i32) -> (i32, i32) {
    %c0_i32 = arith.constant 0 : i32
    %c0_i32_0 = arith.constant 0 : i32
    %c0_i32_1 = arith.constant 0 : i32
    return %c0_i32, %c0_i32_0 : i32, i32
  }
  func.func @transform_3(%arg0: i32) -> (i32, i32) {
    %c0_i32 = arith.constant 0 : i32
    %c0_i32_0 = arith.constant 0 : i32
    return %arg0, %c0_i32 : i32, i32
  }
}

module attributes {stable_mosaic.version = 11 : i64} {
  func.func @_linear_kernel(%arg0: i32, %arg1: memref<16x32xf32, #tpu.memory_space<vmem>>, %arg2: memref<32x96xbf16, #tpu.memory_space<vmem>>, %arg3: memref<1x96xf32, #tpu.memory_space<vmem>>, %arg4: memref<16x96xbf16, #tpu.memory_space<vmem>>) attributes {dimension_semantics = [#tpu.dimension_semantics<parallel>], iteration_bounds = array<i64: 1>, scalar_prefetch = 0 : i64, scratch_operands = 0 : i64, tpu.core_type = #tpu.core_type<tc>, window_params = [{transform_indices = @transform_0, window_bounds = array<i64: 16, 32>}, {pipeline_mode = #tpu.pipeline_mode<synchronous>, transform_indices = @transform_1, window_bounds = array<i64: 32, 96>}, {pipeline_mode = #tpu.pipeline_mode<synchronous>, transform_indices = @transform_2, window_bounds = array<i64: 1, 96>}, {transform_indices = @transform_3, window_bounds = array<i64: 16, 96>}]} {
    %c0 = arith.constant 0 : index
    %c0_0 = arith.constant 0 : index
    %0 = vector.load %arg1[%c0, %c0_0] : memref<16x32xf32, #tpu.memory_space<vmem>>, vector<16x32xf32>
    %1 = arith.truncf %0 : vector<16x32xf32> to vector<16x32xbf16>
    %c0_1 = arith.constant 0 : index
    %c0_2 = arith.constant 0 : index
    %2 = vector.load %arg2[%c0_1, %c0_2] : memref<32x96xbf16, #tpu.memory_space<vmem>>, vector<32x96xbf16>
    %cst = arith.constant dense<0.000000e+00> : vector<16x96xf32>
    %3 = tpu.matmul %1, %2, %cst {dimension_numbers = #tpu.dot_dimension_numbers<[1], [0], [0], [1], [0, 0, 1, 1], [], []>} : vector<16x32xbf16>, vector<32x96xbf16>, vector<16x96xf32> -> vector<16x96xf32>
    %c0_3 = arith.constant 0 : index
    %c0_4 = arith.constant 0 : index
    %4 = vector.load %arg3[%c0_3, %c0_4] : memref<1x96xf32, #tpu.memory_space<vmem>>, vector<1x96xf32>
    %5 = vector.broadcast %4 : vector<1x96xf32> to vector<16x96xf32>
    %6 = arith.addf %3, %5 : vector<16x96xf32>
    %7 = arith.truncf %6 : vector<16x96xf32> to vector<16x96xbf16>
    %c0_5 = arith.constant 0 : index
    %c0_6 = arith.constant 0 : index
    %8 = vector.load %arg4[%c0_5, %c0_6] : memref<16x96xbf16, #tpu.memory_space<vmem>>, vector<16x96xbf16>
    tpu.vector_store %arg4[%c0_5, %c0_6], %7 {strides = array<i32>} : memref<16x96xbf16, #tpu.memory_space<vmem>>, vector<16x96xbf16>,
    return
  }
  func.func @transform_0(%arg0: i32) -> (i32, i32) {
    %c0_i32 = arith.constant 0 : i32
    %c0_i32_0 = arith.constant 0 : i32
    return %arg0, %c0_i32 : i32, i32
  }
  func.func @transform_1(%arg0: i32) -> (i32, i32) {
    %c0_i32 = arith.constant 0 : i32
    %c0_i32_0 = arith.constant 0 : i32
    %c0_i32_1 = arith.constant 0 : i32
    return %c0_i32, %c0_i32_0 : i32, i32
  }
  func.func @transform_2(%arg0: i32) -> (i32, i32) {
    %c0_i32 = arith.constant 0 : i32
    %c0_i32_0 = arith.constant 0 : i32
    %c0_i32_1 = arith.constant 0 : i32
    return %c0_i32, %c0_i32_0 : i32, i32
  }
  func.func @transform_3(%arg0: i32) -> (i32, i32) {
    %c0_i32 = arith.constant 0 : i32
    %c0_i32_0 = arith.constant 0 : i32
    return %arg0, %c0_i32 : i32, i32
  }
}

</mosaic_0001>

<llo_original>
// kernel: tpu_custom_call.1
$region0: #{tpu_custom_call.1}
  #allocation0 [shape = 'u32[]', space=smem, size = 0x4, offset = 0x4, fixed_abs, tag = 'smem constant byte address 0x4 - core index']
  #allocation1 [shape = 'u32[144,128]{1,0:T(1,128)}', space=vmem, size = 0x12000, scoped, tag = 'internal scratch']
  %s0 = inlined_call_operand.hbm [shape: f32[16,32], index: 0, kind: input, shape index: {}]
  %s1 = inlined_call_operand.hbm [shape: bf16[32,96], index: 1, kind: input, shape index: {}]
  %s2 = inlined_call_operand.hbm [shape: f32[1,96], index: 2, kind: input, shape index: {}]
  %s3 = inlined_call_operand.hbm [shape: bf16[16,96], index: 3, kind: output, shape index: {}]
  %s4 = sld [smem:[#allocation0]]
  $region34: #{tpu_custom_call.1} parent=0
    _
  %s6 = ssub.s32 1, %s4
  %s7 = scalar_select 0, %s6, %s4
  $region1: #{tpu_custom_call.1} parent=0
    #allocation2 [shape = 'u8[8192]{0}', space=vmem, size = 0x2000, scoped, tag = 'input window, operand 0, single buffered']
    #allocation3 [shape = 's32[1]{0}', space=sflag, size = 0x4, scoped, tag = 'scoped memory for tpu_custom_call.1']
    #allocation4 [shape = 's32[1]{0}', space=sflag, size = 0x4, scoped, tag = 'scoped memory for tpu_custom_call.1']
    #allocation5 [shape = 'u8[8192]{0}', space=vmem, size = 0x2000, scoped, tag = 'input window, operand 1, single buffered']
    #allocation6 [shape = 's32[1]{0}', space=sflag, size = 0x4, scoped, tag = 'scoped memory for tpu_custom_call.1']
    #allocation7 [shape = 'u8[512]{0}', space=vmem, size = 0x400, scoped, tag = 'input window, operand 2, single buffered']
    #allocation8 [shape = 'u8[4096]{0}', space=vmem, size = 0x1000, scoped, tag = 'output window, operand 0, single buffered']
    %8 = vsyncpa [#allocation3], 0
    %9 = vsyncpa [#allocation6], 0
    %10 = vsyncpa [#allocation4], 0
    // Predicated region
    $region2: #{tpu_custom_call.1} parent=1 // pred_check
      _
    $region3: #{tpu_custom_call.1} parent=1 // pred_check_branch
      %12 = sbr.rel (0) target = $region5
    $region4: #{tpu_custom_call.1} parent=1 // pred_region
      %s14 = ssub.s32 256, 256
      %15 = vsyncadd [#allocation3], %s14
      %s16 = sshll.u32 [#allocation2], 4
      %s17 = int_to_ptr.vmem [resolvable:$true] %s16
      %22 = dma.hbm_to_vmem [thread:$0]  %s0, 256, %s17, [#allocation3], 128, 128, 8
    $region5: #{tpu_custom_call.1} parent=1 // pred_fallthru
      _
    // Predicated region
    $region6: #{tpu_custom_call.1} parent=1 // pred_check
      _
    $region7: #{tpu_custom_call.1} parent=1 // pred_check_branch
      %24 = sbr.rel (0) target = $region9
    $region8: #{tpu_custom_call.1} parent=1 // pred_region
      %s26 = ssub.s32 256, 256
      %27 = vsyncadd [#allocation6], %s26
      %s28 = sshll.u32 [#allocation5], 4
      %s29 = int_to_ptr.vmem [resolvable:$true] %s28
      %34 = dma.hbm_to_vmem [thread:$0]  %s1, 256, %s29, [#allocation6], 64, 64, 4
    $region9: #{tpu_custom_call.1} parent=1 // pred_fallthru
      _
    // Predicated region
    $region10: #{tpu_custom_call.1} parent=1 // pred_check
      _
    $region11: #{tpu_custom_call.1} parent=1 // pred_check_branch
      %36 = sbr.rel (0) target = $region13
    $region12: #{tpu_custom_call.1} parent=1 // pred_region
      %s38 = ssub.s32 16, 16
      %39 = vsyncadd [#allocation6], %s38
      %s41 = sshll.u32 [#allocation7], 4
      %s42 = int_to_ptr.vmem [resolvable:$true] %s41
      %44 = dma.hbm_to_vmem [thread:$0]  %s2, 16, %s42, [#allocation6]
    $region13: #{tpu_custom_call.1} parent=1 // pred_fallthru
      _
    // Predicated region
    $region14: #{tpu_custom_call.1} parent=1 // pred_check
      _
    $region15: #{tpu_custom_call.1} parent=1 // pred_check_branch
      %46 = sbr.rel (0) target = $region17
    $region16: #{tpu_custom_call.1} parent=1 // pred_region
      %47 = dma.done [#allocation3], 256
    $region17: #{tpu_custom_call.1} parent=1 // pred_fallthru
      _
    // Predicated region
    $region18: #{tpu_custom_call.1} parent=1 // pred_check
      _
    $region19: #{tpu_custom_call.1} parent=1 // pred_check_branch
      %49 = sbr.rel (0) target = $region21
    $region20: #{tpu_custom_call.1} parent=1 // pred_region
      %50 = dma.done [#allocation6], 256
    $region21: #{tpu_custom_call.1} parent=1 // pred_fallthru
      _
    // Predicated region
    $region22: #{tpu_custom_call.1} parent=1 // pred_check
      _
    $region23: #{tpu_custom_call.1} parent=1 // pred_check_branch
      %52 = sbr.rel (0) target = $region25
    $region24: #{tpu_custom_call.1} parent=1 // pred_region
      %53 = dma.done [#allocation6], 16
    $region25: #{tpu_custom_call.1} parent=1 // pred_fallthru
      _
    %v55 = vld [vmem:[#allocation2] sm:$0xff]
    %v56 = vld [vmem:[#allocation2 + $0x8] sm:$0xff]
    %v57 = vpack.c.bf16 %v56, %v55
    %v58 = vld [vmem:[#allocation5] sm:$0xf]
    %v59 = vld [vmem:[#allocation5 + $0x4] sm:$0xf]
    %v60 = vld [vmem:[#allocation5 + $0x8] sm:$0xf]
    %v61 = vld [vmem:[#allocation5 + $0xc] sm:$0xf]
    %v62 = vld [vmem:[#allocation7] sm:$0x1]
    %v64 = vlaneseq
    %v65 = vshrl.u32 %v64, 7
    %v66 = vsub.s32 0, %v65
    %v67 = vrot.slane %v62, %v66
    %v73 = vunpack.c.l.b16 %v58
    %v74 = vunpack.c.l.b16 %v59
    %v75 = vunpack.c.l.b16 %v60
    %v76 = vunpack.c.l.b16 %v61
    %v77 = vpack.c.b16 %v74, %v73
    %v78 = vpack.c.b16 %v76, %v75
    %vm81 = vcmask 261120
    %v83 = vsel %vm81, %v57, 0
    %85 = vmatprep.subr.bf16.mxu0 0
    %86 = vmatpush1.bf16.msra.mxu0 %v77
    %87 = vmatprep.subr.bf16.mxu0 0
    %88 = vmatpush1.bf16.msra.mxu0 %v78
    %89 = vmatprep.subr.bf16.mxu0 0
    %90 = vmatpush1.bf16.msra.mxu0 0
    %91 = vmatprep.subr.bf16.mxu0 0
    %92 = vmatpush1.bf16.msra.mxu0 0
    %93 = vmatprep.subr.bf16.mxu0 0
    %94 = vmatpush1.bf16.msra.mxu0 0
    %95 = vmatprep.subr.bf16.mxu0 0
    %96 = vmatpush1.bf16.msra.mxu0 0
    %97 = vmatprep.subr.bf16.mxu0 0
    %98 = vmatpush1.bf16.msra.mxu0 0
    %99 = vmatprep.subr.bf16.mxu0 0
    %100 = vmatpush1.bf16.msra.mxu0 0
    %101 = vmatprep.subr.bf16.mxu0 0
    %102 = vmatpush1.bf16.msra.mxu0 0
    %103 = vmatprep.subr.bf16.mxu0 0
    %104 = vmatpush1.bf16.msra.mxu0 0
    %105 = vmatprep.subr.bf16.mxu0 0
    %106 = vmatpush1.bf16.msra.mxu0 0
    %107 = vmatprep.subr.bf16.mxu0 0
    %108 = vmatpush1.bf16.msra.mxu0 0
    %109 = vmatprep.subr.bf16.mxu0 0
    %110 = vmatpush1.bf16.msra.mxu0 0
    %111 = vmatprep.subr.bf16.mxu0 0
    %112 = vmatpush1.bf16.msra.mxu0 0
    %113 = vmatprep.subr.bf16.mxu0 0
    %114 = vmatpush1.bf16.msra.mxu0 0
    %115 = vmatprep.subr.bf16.mxu0 0
    %116 = vmatpush1.bf16.msra.mxu0 0
    %117 = vmatprep.mubr.bf16.mxu0 0
    %118 = vmatmul.mubr.bf16.gmra.mrb[0].mxu0 %v83
    %v119 = vpop.f32.mrb[0].mxu0
    %v120 = vadd.f32 %v67, %v119
    %v121 = vpop.f32.mrb[0].mxu0
    %v122 = vpop.f32.mrb[0].mxu0
    %v123 = vadd.f32 %v67, %v122
    %v124 = vpop.f32.mrb[0].mxu0
    %125 = vdwg.mxu0
    %v126 = vpack.c.bf16 %v123, %v120
    %v128 = vunpack.c.l.b16 %v126
    %v129 = vunpack.c.h.b16 %v126
    %v130 = vpack.c.b16 %v128, %v128
    %v131 = vpack.c.b16 %v129, %v129
    %vm134 = vcmask 781312
    %135 = vst.msk [vmem:[#allocation8] sm:$0xf] %vm134, %v130
    %136 = vst.msk [vmem:[#allocation8 + $0x4] sm:$0xf] %vm134, %v131
    // Predicated region
    $region26: #{tpu_custom_call.1} parent=1 // pred_check
      _
    $region27: #{tpu_custom_call.1} parent=1 // pred_check_branch
      %138 = sbr.rel (0) target = $region29
    $region28: #{tpu_custom_call.1} parent=1 // pred_region
      %s140 = ssub.s32 128, 128
      %141 = vsyncadd [#allocation4], %s140
      %s142 = sshll.u32 [#allocation8], 4
      %s143 = int_to_ptr.vmem [resolvable:$true] %s142
      %148 = dma.vmem_to_hbm [thread:$0]  %s143, 128, %s3, [#allocation4], 64, 64, 4
    $region29: #{tpu_custom_call.1} parent=1 // pred_fallthru
      _
    // Predicated region
    $region30: #{tpu_custom_call.1} parent=1 // pred_check
      _
    $region31: #{tpu_custom_call.1} parent=1 // pred_check_branch
      %150 = sbr.rel (0) target = $region33
    $region32: #{tpu_custom_call.1} parent=1 // pred_region
      %151 = dma.done [#allocation4], 128
    $region33: #{tpu_custom_call.1} parent=1 // pred_fallthru
      _
    %152 = vsyncpa [#allocation3], 1
    %153 = vsyncpa [#allocation6], 1
    %154 = vsyncpa [#allocation4], 1

// kernel: tpu_custom_call.1
$region0: #{tpu_custom_call.1}
  #allocation0 [shape = 'u32[]', space=smem, size = 0x4, offset = 0x4, fixed_abs, tag = 'smem constant byte address 0x4 - core index']
  #allocation1 [shape = 'u32[144,128]{1,0:T(1,128)}', space=vmem, size = 0x12000, scoped, tag = 'internal scratch']
  %s0 = inlined_call_operand.hbm [shape: f32[16,32], index: 0, kind: input, shape index: {}]
  %s1 = inlined_call_operand.hbm [shape: bf16[32,96], index: 1, kind: input, shape index: {}]
  %s2 = inlined_call_operand.hbm [shape: f32[1,96], index: 2, kind: input, shape index: {}]
  %s3 = inlined_call_operand.hbm [shape: bf16[16,96], index: 3, kind: output, shape index: {}]
  %s4 = sld [smem:[#allocation0]]
  $region34: #{tpu_custom_call.1} parent=0
    _
  %s6 = ssub.s32 1, %s4
  %s7 = scalar_select 0, %s6, %s4
  $region1: #{tpu_custom_call.1} parent=0
    #allocation2 [shape = 'u8[8192]{0}', space=vmem, size = 0x2000, scoped, tag = 'input window, operand 0, single buffered']
    #allocation3 [shape = 's32[1]{0}', space=sflag, size = 0x4, scoped, tag = 'scoped memory for tpu_custom_call.1']
    #allocation4 [shape = 's32[1]{0}', space=sflag, size = 0x4, scoped, tag = 'scoped memory for tpu_custom_call.1']
    #allocation5 [shape = 'u8[8192]{0}', space=vmem, size = 0x2000, scoped, tag = 'input window, operand 1, single buffered']
    #allocation6 [shape = 's32[1]{0}', space=sflag, size = 0x4, scoped, tag = 'scoped memory for tpu_custom_call.1']
    #allocation7 [shape = 'u8[512]{0}', space=vmem, size = 0x400, scoped, tag = 'input window, operand 2, single buffered']
    #allocation8 [shape = 'u8[4096]{0}', space=vmem, size = 0x1000, scoped, tag = 'output window, operand 0, single buffered']
    %8 = vsyncpa [#allocation3], 0
    %9 = vsyncpa [#allocation6], 0
    %10 = vsyncpa [#allocation4], 0
    // Predicated region
    $region2: #{tpu_custom_call.1} parent=1 // pred_check
      _
    $region3: #{tpu_custom_call.1} parent=1 // pred_check_branch
      %12 = sbr.rel (0) target = $region5
    $region4: #{tpu_custom_call.1} parent=1 // pred_region
      %s14 = ssub.s32 256, 256
      %15 = vsyncadd [#allocation3], %s14
      %s16 = sshll.u32 [#allocation2], 4
      %s17 = int_to_ptr.vmem [resolvable:$true] %s16
      %22 = dma.hbm_to_vmem [thread:$0]  %s0, 256, %s17, [#allocation3], 128, 128, 8
    $region5: #{tpu_custom_call.1} parent=1 // pred_fallthru
      _
    // Predicated region
    $region6: #{tpu_custom_call.1} parent=1 // pred_check
      _
    $region7: #{tpu_custom_call.1} parent=1 // pred_check_branch
      %24 = sbr.rel (0) target = $region9
    $region8: #{tpu_custom_call.1} parent=1 // pred_region
      %s26 = ssub.s32 256, 256
      %27 = vsyncadd [#allocation6], %s26
      %s28 = sshll.u32 [#allocation5], 4
      %s29 = int_to_ptr.vmem [resolvable:$true] %s28
      %34 = dma.hbm_to_vmem [thread:$0]  %s1, 256, %s29, [#allocation6], 64, 64, 4
    $region9: #{tpu_custom_call.1} parent=1 // pred_fallthru
      _
    // Predicated region
    $region10: #{tpu_custom_call.1} parent=1 // pred_check
      _
    $region11: #{tpu_custom_call.1} parent=1 // pred_check_branch
      %36 = sbr.rel (0) target = $region13
    $region12: #{tpu_custom_call.1} parent=1 // pred_region
      %s38 = ssub.s32 16, 16
      %39 = vsyncadd [#allocation6], %s38
      %s41 = sshll.u32 [#allocation7], 4
      %s42 = int_to_ptr.vmem [resolvable:$true] %s41
      %44 = dma.hbm_to_vmem [thread:$0]  %s2, 16, %s42, [#allocation6]
    $region13: #{tpu_custom_call.1} parent=1 // pred_fallthru
      _
    // Predicated region
    $region14: #{tpu_custom_call.1} parent=1 // pred_check
      _
    $region15: #{tpu_custom_call.1} parent=1 // pred_check_branch
      %46 = sbr.rel (0) target = $region17
    $region16: #{tpu_custom_call.1} parent=1 // pred_region
      %47 = dma.done [#allocation3], 256
    $region17: #{tpu_custom_call.1} parent=1 // pred_fallthru
      _
    // Predicated region
    $region18: #{tpu_custom_call.1} parent=1 // pred_check
      _
    $region19: #{tpu_custom_call.1} parent=1 // pred_check_branch
      %49 = sbr.rel (0) target = $region21
    $region20: #{tpu_custom_call.1} parent=1 // pred_region
      %50 = dma.done [#allocation6], 256
    $region21: #{tpu_custom_call.1} parent=1 // pred_fallthru
      _
    // Predicated region
    $region22: #{tpu_custom_call.1} parent=1 // pred_check
      _
    $region23: #{tpu_custom_call.1} parent=1 // pred_check_branch
      %52 = sbr.rel (0) target = $region25
    $region24: #{tpu_custom_call.1} parent=1 // pred_region
      %53 = dma.done [#allocation6], 16
    $region25: #{tpu_custom_call.1} parent=1 // pred_fallthru
      _
    %v55 = vld [vmem:[#allocation2] sm:$0xff]
    %v56 = vld [vmem:[#allocation2 + $0x8] sm:$0xff]
    %v57 = vpack.c.bf16 %v56, %v55
    %v58 = vld [vmem:[#allocation5] sm:$0xf]
    %v59 = vld [vmem:[#allocation5 + $0x4] sm:$0xf]
    %v60 = vld [vmem:[#allocation5 + $0x8] sm:$0xf]
    %v61 = vld [vmem:[#allocation5 + $0xc] sm:$0xf]
    %v62 = vld [vmem:[#allocation7] sm:$0x1]
    %v64 = vlaneseq
    %v65 = vshrl.u32 %v64, 7
    %v66 = vsub.s32 0, %v65
    %v67 = vrot.slane %v62, %v66
    %v73 = vunpack.c.l.b16 %v58
    %v74 = vunpack.c.l.b16 %v59
    %v75 = vunpack.c.l.b16 %v60
    %v76 = vunpack.c.l.b16 %v61
    %v77 = vpack.c.b16 %v74, %v73
    %v78 = vpack.c.b16 %v76, %v75
    %vm81 = vcmask 261120
    %v83 = vsel %vm81, %v57, 0
    %85 = vmatprep.subr.bf16.mxu0 0
    %86 = vmatpush1.bf16.msra.mxu0 %v77
    %87 = vmatprep.subr.bf16.mxu0 0
    %88 = vmatpush1.bf16.msra.mxu0 %v78
    %89 = vmatprep.subr.bf16.mxu0 0
    %90 = vmatpush1.bf16.msra.mxu0 0
    %91 = vmatprep.subr.bf16.mxu0 0
    %92 = vmatpush1.bf16.msra.mxu0 0
    %93 = vmatprep.subr.bf16.mxu0 0
    %94 = vmatpush1.bf16.msra.mxu0 0
    %95 = vmatprep.subr.bf16.mxu0 0
    %96 = vmatpush1.bf16.msra.mxu0 0
    %97 = vmatprep.subr.bf16.mxu0 0
    %98 = vmatpush1.bf16.msra.mxu0 0
    %99 = vmatprep.subr.bf16.mxu0 0
    %100 = vmatpush1.bf16.msra.mxu0 0
    %101 = vmatprep.subr.bf16.mxu0 0
    %102 = vmatpush1.bf16.msra.mxu0 0
    %103 = vmatprep.subr.bf16.mxu0 0
    %104 = vmatpush1.bf16.msra.mxu0 0
    %105 = vmatprep.subr.bf16.mxu0 0
    %106 = vmatpush1.bf16.msra.mxu0 0
    %107 = vmatprep.subr.bf16.mxu0 0
    %108 = vmatpush1.bf16.msra.mxu0 0
    %109 = vmatprep.subr.bf16.mxu0 0
    %110 = vmatpush1.bf16.msra.mxu0 0
    %111 = vmatprep.subr.bf16.mxu0 0
    %112 = vmatpush1.bf16.msra.mxu0 0
    %113 = vmatprep.subr.bf16.mxu0 0
    %114 = vmatpush1.bf16.msra.mxu0 0
    %115 = vmatprep.subr.bf16.mxu0 0
    %116 = vmatpush1.bf16.msra.mxu0 0
    %117 = vmatprep.mubr.bf16.mxu0 0
    %118 = vmatmul.mubr.bf16.gmra.mrb[0].mxu0 %v83
    %v119 = vpop.f32.mrb[0].mxu0
    %v120 = vadd.f32 %v67, %v119
    %v121 = vpop.f32.mrb[0].mxu0
    %v122 = vpop.f32.mrb[0].mxu0
    %v123 = vadd.f32 %v67, %v122
    %v124 = vpop.f32.mrb[0].mxu0
    %125 = vdwg.mxu0
    %v126 = vpack.c.bf16 %v123, %v120
    %v128 = vunpack.c.l.b16 %v126
    %v129 = vunpack.c.h.b16 %v126
    %v130 = vpack.c.b16 %v128, %v128
    %v131 = vpack.c.b16 %v129, %v129
    %vm134 = vcmask 781312
    %135 = vst.msk [vmem:[#allocation8] sm:$0xf] %vm134, %v130
    %136 = vst.msk [vmem:[#allocation8 + $0x4] sm:$0xf] %vm134, %v131
    // Predicated region
    $region26: #{tpu_custom_call.1} parent=1 // pred_check
      _
    $region27: #{tpu_custom_call.1} parent=1 // pred_check_branch
      %138 = sbr.rel (0) target = $region29
    $region28: #{tpu_custom_call.1} parent=1 // pred_region
      %s140 = ssub.s32 128, 128
      %141 = vsyncadd [#allocation4], %s140
      %s142 = sshll.u32 [#allocation8], 4
      %s143 = int_to_ptr.vmem [resolvable:$true] %s142
      %148 = dma.vmem_to_hbm [thread:$0]  %s143, 128, %s3, [#allocation4], 64, 64, 4
    $region29: #{tpu_custom_call.1} parent=1 // pred_fallthru
      _
    // Predicated region
    $region30: #{tpu_custom_call.1} parent=1 // pred_check
      _
    $region31: #{tpu_custom_call.1} parent=1 // pred_check_branch
      %150 = sbr.rel (0) target = $region33
    $region32: #{tpu_custom_call.1} parent=1 // pred_region
      %151 = dma.done [#allocation4], 128
    $region33: #{tpu_custom_call.1} parent=1 // pred_fallthru
      _
    %152 = vsyncpa [#allocation3], 1
    %153 = vsyncpa [#allocation6], 1
    %154 = vsyncpa [#allocation4], 1

</llo_original>
